<compile_context>
chip_gen: v5e
topology: v5e:2x2
jax: 0.10.0
libtpu: 0.0.40
codegen_flags: <defaults>
</compile_context>

<pallas_src>
import jax
import jax.numpy as jnp
from jax.experimental import pallas as pl
from jax.experimental.pallas import tpu as pltpu


def _round_up(v, m):
    return ((v + m - 1) // m) * m


def _deep_ensembles_kernel(x_ref, w1_ref, b1_ref, w2_ref, b2_ref, out_ref):
    """Fused forward of all N ensemble members (one batch tile).

    x_ref  : (Bt, D)            bf16  shared flattened input tile
    w1_ref : (D, Hcat_p)        bf16  layer-1 weights, concatenated over members
    b1_ref : (1, Hcat_p)        f32
    w2_ref : (Hcat_p, N*Cp)     bf16  block-diagonal layer-2 weights
    b2_ref : (1, N*Cp)          f32
    out_ref: (Bt, N*Cp)         f32   member-blocked logits slab
    """
    # layer 1 for ALL members at once on the MXU, f32 accumulation; ReLU on VPU.
    h = jnp.dot(x_ref[...], w1_ref[...], preferred_element_type=jnp.float32)
    h = jnp.maximum(h + b1_ref[...], 0.0)                    # (Bt, Hcat_p) f32

    # layer 2: single block-diagonal matmul (bf16 operands, f32 accumulation).
    logits = jnp.dot(h.astype(jnp.bfloat16), w2_ref[...],
                     preferred_element_type=jnp.float32)     # (Bt, N*Cp)
    out_ref[...] = (logits + b2_ref[...]).astype(out_ref.dtype)


def prepare_deep_ensembles_params(w1, b1, w2, b2):
    """One-off (init-time) weight layout: pad/concat/block-diag/cast.

    Args:
        w1: (N, D, H)  per-member first-layer weights
        b1: (N, H)
        w2: (N, H, C)  per-member second-layer weights (C = num classes)
        b2: (N, C)
    Returns:
        dict of pre-laid-out device buffers + static dims, consumed by
        `deep_ensembles_forward`.
    """
    num_est, feat_in, hidden = w1.shape
    num_classes = w2.shape[-1]
    hcat = num_est * hidden
    hcat_p = _round_up(hcat, 128)          # pad ONCE on the concatenated axis
    cp = _round_up(num_classes, 128)       # lane-dense per-member class block
    out_w = num_est * cp

    # W1: (N, D, H) -> (D, N*H) member-major columns, zero-pad to Hcat_p, bf16.
    w1_cat = jnp.transpose(w1, (1, 0, 2)).reshape(feat_in, hcat)
    w1_cat = jnp.pad(w1_cat, ((0, 0), (0, hcat_p - hcat))).astype(jnp.bfloat16)
    b1_cat = jnp.pad(b1.reshape(1, hcat),
                     ((0, 0), (0, hcat_p - hcat))).astype(jnp.float32)

    # Block-diagonal W2: rows = packed hidden, cols = N blocks of Cp (bf16).
    w2_bd = jnp.zeros((hcat_p, out_w), jnp.float32)
    b2_cat = jnp.zeros((1, out_w), jnp.float32)
    for i in range(num_est):
        w2_bd = w2_bd.at[i * hidden:(i + 1) * hidden,
                         i * cp:i * cp + num_classes].set(w2[i])
        b2_cat = b2_cat.at[0, i * cp:i * cp + num_classes].set(b2[i])
    w2_bd = w2_bd.astype(jnp.bfloat16)

    return dict(
        w1_cat=w1_cat, b1_cat=b1_cat, w2_bd=w2_bd, b2_cat=b2_cat,
        num_est=num_est, feat_in=feat_in, hidden=hidden,
        num_classes=num_classes, hcat_p=hcat_p, cp=cp, out_w=out_w,
    )


def deep_ensembles_forward(x_nchw, params, *, batch_tile=256):
    """Pallas implementation of _DeepEnsembles.forward.

    Args:
        x_nchw: (B, C_in, H_img, W_img) input, NCHW like PyTorch.
        params: output of `prepare_deep_ensembles_params` (weights already
                padded / transposed / cast at init time).
    Returns:
        (N*B, C) float32 logits, estimator-major (== torch.cat(preds, dim=0)).
    """
    batch = x_nchw.shape[0]
    feat_in = params["feat_in"]
    num_est = params["num_est"]
    num_classes = params["num_classes"]
    hcat_p = params["hcat_p"]
    cp = params["cp"]
    out_w = params["out_w"]

    # Per-call input prep only: flatten NCHW -> (B, D) (== torch.flatten(x, 1)).
    x_bf = x_nchw.reshape(batch, feat_in).astype(jnp.bfloat16)

    # Batch grid axis (parallel -> megacore sharding on v7x; grid=(1,) at B=2).
    bt = batch if batch <= batch_tile else batch_tile
    grid = (pl.cdiv(batch, bt),)

    w1_cat, b1_cat = params["w1_cat"], params["b1_cat"]
    w2_bd, b2_cat = params["w2_bd"], params["b2_cat"]

    flops = 2 * batch * feat_in * hcat_p + 2 * batch * hcat_p * out_w
    bytes_accessed = (x_bf.size * 2 + w1_cat.size * 2 + b1_cat.size * 4
                      + w2_bd.size * 2 + b2_cat.size * 4
                      + batch * out_w * 4)

    out = pl.pallas_call(
        _deep_ensembles_kernel,
        out_shape=jax.ShapeDtypeStruct((batch, out_w), jnp.float32),
        grid=grid,
        in_specs=[
            pl.BlockSpec((bt, feat_in), lambda i: (i, 0)),     # x tile
            pl.BlockSpec((feat_in, hcat_p), lambda i: (0, 0)), # W1 (resident)
            pl.BlockSpec((1, hcat_p), lambda i: (0, 0)),       # b1
            pl.BlockSpec((hcat_p, out_w), lambda i: (0, 0)),   # W2 block-diag
            pl.BlockSpec((1, out_w), lambda i: (0, 0)),        # b2
        ],
        out_specs=pl.BlockSpec((bt, out_w), lambda i: (i, 0)),
        compiler_params=pltpu.CompilerParams(
            dimension_semantics=("parallel",)),
        cost_estimate=pl.CostEstimate(
            flops=flops, transcendentals=0, bytes_accessed=bytes_accessed),
    )(x_bf, w1_cat, b1_cat, w2_bd, b2_cat)

    # (B, N*Cp) -> (B, N, Cp) -> (N, B, Cp) -> (N*B, C): estimator-major,
    # strip lane padding. Tiny wrapper-side reshape (a few KB).
    out = out.reshape(batch, num_est, cp).transpose(1, 0, 2)
    return out.reshape(num_est * batch, cp)[:, :num_classes]


def _reference_forward(x_nchw, w1, b1, w2, b2):
    """Pure-JAX reference mirroring the kernel's bf16-operand / f32-accumulate
    precision (PyTorch semantics modulo bf16 MXU rounding)."""
    batch = x_nchw.shape[0]
    x32 = x_nchw.reshape(batch, -1).astype(jnp.bfloat16).astype(jnp.float32)
    preds = []
    for i in range(w1.shape[0]):
        w1i = w1[i].astype(jnp.bfloat16).astype(jnp.float32)
        h = jnp.maximum(
            jnp.dot(x32, w1i, precision=jax.lax.Precision.HIGHEST)
            + b1[i][None, :], 0.0)
        h = h.astype(jnp.bfloat16).astype(jnp.float32)
        w2i = w2[i].astype(jnp.bfloat16).astype(jnp.float32)
        preds.append(
            jnp.dot(h, w2i, precision=jax.lax.Precision.HIGHEST)
            + b2[i][None, :])
    return jnp.concatenate(preds, axis=0)


if __name__ == "__main__":
    key = jax.random.PRNGKey(0)

    # Small shapes consistent with a classification ensemble on image input.
    batch, c_in, img_h, img_w = 2, 4, 16, 16     # NCHW input
    num_estimators = 3                           # len(models)
    feat_in = c_in * img_h * img_w               # 1024
    hidden = 64
    num_classes = 10

    k_x, k_w1, k_b1, k_w2, k_b2 = jax.random.split(key, 5)

    x = jax.random.normal(k_x, (batch, c_in, img_h, img_w), dtype=jnp.float32)

    # Deterministic per-member parameter init (synthetic, not a checkpoint).
    w1 = 0.02 * jax.random.normal(k_w1, (num_estimators, feat_in, hidden), jnp.float32)
    b1 = 0.01 * jax.random.normal(k_b1, (num_estimators, hidden), jnp.float32)
    w2 = 0.02 * jax.random.normal(k_w2, (num_estimators, hidden, num_classes), jnp.float32)
    b2 = 0.01 * jax.random.normal(k_b2, (num_estimators, num_classes), jnp.float32)

    # TODO(synk): `store_on_cpu` / `.to()` device shuttling is host-side
    # framework logic with no Pallas-kernel equivalent; only forward math here.

    # One-off init-time layout (hoisted out of the per-call forward path).
    params = prepare_deep_ensembles_params(w1, b1, w2, b2)
    params = jax.tree_util.tree_map(
        lambda a: jax.block_until_ready(a) if isinstance(a, jax.Array) else a,
        params)

    out = deep_ensembles_forward(x, params)
    out = jax.block_until_ready(out)

    assert out.shape == (num_estimators * batch, num_classes), out.shape

    ref = jax.block_until_ready(_reference_forward(x, w1, b1, w2, b2))
    assert jnp.allclose(out, ref, atol=2e-3, rtol=2e-3), (
        float(jnp.max(jnp.abs(out - ref)))
    )

    print("KERNEL_OK")
</pallas_src>

<mosaic_0001>
module attributes {stable_mosaic.version = 11 : i64} {
  func.func @_deep_ensembles_kernel(%arg0: i32, %arg1: memref<2x1024xbf16, #tpu.memory_space<vmem>>, %arg2: memref<1024x256xbf16, #tpu.memory_space<vmem>>, %arg3: memref<1x256xf32, #tpu.memory_space<vmem>>, %arg4: memref<256x384xbf16, #tpu.memory_space<vmem>>, %arg5: memref<1x384xf32, #tpu.memory_space<vmem>>, %arg6: memref<2x384xf32, #tpu.memory_space<vmem>>) attributes {dimension_semantics = [#tpu.dimension_semantics<parallel>], iteration_bounds = array<i64: 1>, scalar_prefetch = 0 : i64, scratch_operands = 0 : i64, tpu.core_type = #tpu.core_type<tc>, window_params = [{transform_indices = @transform_0, window_bounds = array<i64: 2, 1024>}, {pipeline_mode = #tpu.pipeline_mode<synchronous>, transform_indices = @transform_1, window_bounds = array<i64: 1024, 256>}, {pipeline_mode = #tpu.pipeline_mode<synchronous>, transform_indices = @transform_2, window_bounds = array<i64: 1, 256>}, {pipeline_mode = #tpu.pipeline_mode<synchronous>, transform_indices = @transform_3, window_bounds = array<i64: 256, 384>}, {pipeline_mode = #tpu.pipeline_mode<synchronous>, transform_indices = @transform_4, window_bounds = array<i64: 1, 384>}, {transform_indices = @transform_5, window_bounds = array<i64: 2, 384>}]} {
    %c0 = arith.constant 0 : index
    %c0_0 = arith.constant 0 : index
    %0 = vector.load %arg1[%c0, %c0_0] : memref<2x1024xbf16, #tpu.memory_space<vmem>>, vector<2x1024xbf16>
    %c0_1 = arith.constant 0 : index
    %c0_2 = arith.constant 0 : index
    %1 = vector.load %arg2[%c0_1, %c0_2] : memref<1024x256xbf16, #tpu.memory_space<vmem>>, vector<1024x256xbf16>
    %cst = arith.constant dense<0.000000e+00> : vector<2x256xf32>
    %2 = tpu.matmul %0, %1, %cst {dimension_numbers = #tpu.dot_dimension_numbers<[1], [0], [0], [1], [0, 0, 1, 1], [], []>} : vector<2x1024xbf16>, vector<1024x256xbf16>, vector<2x256xf32> -> vector<2x256xf32>
    %c0_3 = arith.constant 0 : index
    %c0_4 = arith.constant 0 : index
    %3 = vector.load %arg3[%c0_3, %c0_4] : memref<1x256xf32, #tpu.memory_space<vmem>>, vector<1x256xf32>
    %4 = vector.broadcast %3 : vector<1x256xf32> to vector<2x256xf32>
    %5 = arith.addf %2, %4 : vector<2x256xf32>
    %cst_5 = arith.constant 0.000000e+00 : f32
    %6 = vector.broadcast %cst_5 : f32 to vector<2x256xf32>
    %7 = arith.maximumf %5, %6 : vector<2x256xf32>
    %8 = arith.truncf %7 : vector<2x256xf32> to vector<2x256xbf16>
    %c0_6 = arith.constant 0 : index
    %c0_7 = arith.constant 0 : index
    %9 = vector.load %arg4[%c0_6, %c0_7] : memref<256x384xbf16, #tpu.memory_space<vmem>>, vector<256x384xbf16>
    %cst_8 = arith.constant dense<0.000000e+00> : vector<2x384xf32>
    %10 = tpu.matmul %8, %9, %cst_8 {dimension_numbers = #tpu.dot_dimension_numbers<[1], [0], [0], [1], [0, 0, 1, 1], [], []>} : vector<2x256xbf16>, vector<256x384xbf16>, vector<2x384xf32> -> vector<2x384xf32>
    %c0_9 = arith.constant 0 : index
    %c0_10 = arith.constant 0 : index
    %11 = vector.load %arg5[%c0_9, %c0_10] : memref<1x384xf32, #tpu.memory_space<vmem>>, vector<1x384xf32>
    %12 = vector.broadcast %11 : vector<1x384xf32> to vector<2x384xf32>
    %13 = arith.addf %10, %12 : vector<2x384xf32>
    %c0_11 = arith.constant 0 : index
    %c0_12 = arith.constant 0 : index
    %14 = vector.load %arg6[%c0_11, %c0_12] : memref<2x384xf32, #tpu.memory_space<vmem>>, vector<2x384xf32>
    tpu.vector_store %arg6[%c0_11, %c0_12], %13 {strides = array<i32>} : memref<2x384xf32, #tpu.memory_space<vmem>>, vector<2x384xf32>,
    return
  }
  func.func @transform_0(%arg0: i32) -> (i32, i32) {
    %c0_i32 = arith.constant 0 : i32
    %c0_i32_0 = arith.constant 0 : i32
    return %arg0, %c0_i32 : i32, i32
  }
  func.func @transform_1(%arg0: i32) -> (i32, i32) {
    %c0_i32 = arith.constant 0 : i32
    %c0_i32_0 = arith.constant 0 : i32
    %c0_i32_1 = arith.constant 0 : i32
    return %c0_i32, %c0_i32_0 : i32, i32
  }
  func.func @transform_2(%arg0: i32) -> (i32, i32) {
    %c0_i32 = arith.constant 0 : i32
    %c0_i32_0 = arith.constant 0 : i32
    %c0_i32_1 = arith.constant 0 : i32
    return %c0_i32, %c0_i32_0 : i32, i32
  }
  func.func @transform_3(%arg0: i32) -> (i32, i32) {
    %c0_i32 = arith.constant 0 : i32
    %c0_i32_0 = arith.constant 0 : i32
    %c0_i32_1 = arith.constant 0 : i32
    return %c0_i32, %c0_i32_0 : i32, i32
  }
  func.func @transform_4(%arg0: i32) -> (i32, i32) {
    %c0_i32 = arith.constant 0 : i32
    %c0_i32_0 = arith.constant 0 : i32
    %c0_i32_1 = arith.constant 0 : i32
    return %c0_i32, %c0_i32_0 : i32, i32
  }
  func.func @transform_5(%arg0: i32) -> (i32, i32) {
    %c0_i32 = arith.constant 0 : i32
    %c0_i32_0 = arith.constant 0 : i32
    return %arg0, %c0_i32 : i32, i32
  }
}

</mosaic_0001>

<llo_original>
// kernel: tpu_custom_call.1
$region0: #{tpu_custom_call.1}
  #allocation0 [shape = 'u32[]', space=smem, size = 0x4, offset = 0x4, fixed_abs, tag = 'smem constant byte address 0x4 - core index']
  #allocation1 [shape = 'u32[72,128]{1,0:T(1,128)}', space=vmem, size = 0x9000, scoped, tag = 'internal scratch']
  %s0 = inlined_call_operand.hbm [shape: bf16[2,1024], index: 0, kind: input, shape index: {}]
  %s1 = inlined_call_operand.hbm [shape: bf16[1024,256], index: 1, kind: input, shape index: {}]
  %s2 = inlined_call_operand.hbm [shape: f32[1,256], index: 2, kind: input, shape index: {}]
  %s3 = inlined_call_operand.hbm [shape: bf16[256,384], index: 3, kind: input, shape index: {}]
  %s4 = inlined_call_operand.vmem [shape: f32[1,384], index: 4, kind: input, shape index: {}]
  %s5 = inlined_call_operand.hbm [shape: f32[2,384], index: 5, kind: output, shape index: {}]
  %s6 = sld [smem:[#allocation0]]
  $region46: #{tpu_custom_call.1} parent=0
    _
  %s8 = ssub.s32 1, %s6
  %s9 = scalar_select 0, %s8, %s6
  $region1: #{tpu_custom_call.1} parent=0
    #allocation2 [shape = 'u8[4096]{0}', space=vmem, size = 0x1000, scoped, tag = 'input window, operand 0, single buffered']
    #allocation3 [shape = 's32[1]{0}', space=sflag, size = 0x4, scoped, tag = 'scoped memory for tpu_custom_call.1']
    #allocation4 [shape = 's32[1]{0}', space=sflag, size = 0x4, scoped, tag = 'scoped memory for tpu_custom_call.1']
    #allocation5 [shape = 'u8[524288]{0}', space=vmem, size = 0x80000, scoped, tag = 'input window, operand 1, single buffered']
    #allocation6 [shape = 's32[1]{0}', space=sflag, size = 0x4, scoped, tag = 'scoped memory for tpu_custom_call.1']
    #allocation7 [shape = 'u8[1024]{0}', space=vmem, size = 0x400, scoped, tag = 'input window, operand 2, single buffered']
    #allocation8 [shape = 'u8[196608]{0}', space=vmem, size = 0x30000, scoped, tag = 'input window, operand 3, single buffered']
    #allocation9 [shape = 's32[1]{0}', space=sflag, size = 0x4, scoped, tag = 'scoped memory for tpu_custom_call.1']
    #allocation10 [shape = 'u8[3072]{0}', space=vmem, size = 0xc00, scoped, tag = 'output window, operand 0, single buffered']
    %10 = vsyncpa [#allocation3], 0
    %11 = vsyncpa [#allocation6], 0
    %12 = vsyncpa [#allocation9], 0
    %13 = vsyncpa [#allocation4], 0
    // Predicated region
    $region2: #{tpu_custom_call.1} parent=1 // pred_check
      _
    $region3: #{tpu_custom_call.1} parent=1 // pred_check_branch
      %15 = sbr.rel (0) target = $region5
    $region4: #{tpu_custom_call.1} parent=1 // pred_region
      %17 = vsyncadd [#allocation3], 0
      %s19 = sshll.u32 %s0, 4
      %s20 = int_to_ptr.hbm [resolvable:$true] %s19
      %s21 = sshll.u32 [#allocation2], 4
      %s22 = int_to_ptr.vmem [resolvable:$true] %s21
      %24 = dma.hbm_to_vmem [thread:$0]  %s20, 128, %s22, [#allocation3]
    $region5: #{tpu_custom_call.1} parent=1 // pred_fallthru
      _
    // Predicated region
    $region6: #{tpu_custom_call.1} parent=1 // pred_check
      _
    $region7: #{tpu_custom_call.1} parent=1 // pred_check_branch
      %26 = sbr.rel (0) target = $region9
    $region8: #{tpu_custom_call.1} parent=1 // pred_region
      %28 = vsyncadd [#allocation6], 0
      %s29 = sshll.u32 %s1, 4
      %s30 = int_to_ptr.hbm [resolvable:$true] %s29
      %s31 = sshll.u32 [#allocation5], 4
      %s32 = int_to_ptr.vmem [resolvable:$true] %s31
      %37 = dma.hbm_to_vmem [thread:$0]  %s30, 16384, %s32, [#allocation6], 128, 128, 8
    $region9: #{tpu_custom_call.1} parent=1 // pred_fallthru
      _
    // Predicated region
    $region10: #{tpu_custom_call.1} parent=1 // pred_check
      _
    $region11: #{tpu_custom_call.1} parent=1 // pred_check_branch
      %39 = sbr.rel (0) target = $region13
    $region12: #{tpu_custom_call.1} parent=1 // pred_region
      %41 = vsyncadd [#allocation6], 0
      %s43 = sshll.u32 %s2, 4
      %s44 = int_to_ptr.hbm [resolvable:$true] %s43
      %s45 = sshll.u32 [#allocation7], 4
      %s46 = int_to_ptr.vmem [resolvable:$true] %s45
      %48 = dma.hbm_to_vmem [thread:$0]  %s44, 32, %s46, [#allocation6]
    $region13: #{tpu_custom_call.1} parent=1 // pred_fallthru
      _
    // Predicated region
    $region14: #{tpu_custom_call.1} parent=1 // pred_check
      _
    $region15: #{tpu_custom_call.1} parent=1 // pred_check_branch
      %50 = sbr.rel (0) target = $region17
    $region16: #{tpu_custom_call.1} parent=1 // pred_region
      %52 = vsyncadd [#allocation9], 0
      %s53 = sshll.u32 %s3, 4
      %s54 = int_to_ptr.hbm [resolvable:$true] %s53
      %s55 = sshll.u32 [#allocation8], 4
      %s56 = int_to_ptr.vmem [resolvable:$true] %s55
      %61 = dma.hbm_to_vmem [thread:$0]  %s54, 6144, %s56, [#allocation9], 192, 192, 12
    $region17: #{tpu_custom_call.1} parent=1 // pred_fallthru
      _
    // Predicated region
    $region18: #{tpu_custom_call.1} parent=1 // pred_check
      _
    $region19: #{tpu_custom_call.1} parent=1 // pred_check_branch
      %63 = sbr.rel (0) target = $region21
    $region20: #{tpu_custom_call.1} parent=1 // pred_region
      _
    $region21: #{tpu_custom_call.1} parent=1 // pred_fallthru
      _
    // Predicated region
    $region22: #{tpu_custom_call.1} parent=1 // pred_check
      _
    $region23: #{tpu_custom_call.1} parent=1 // pred_check_branch
      %65 = sbr.rel (0) target = $region25
    $region24: #{tpu_custom_call.1} parent=1 // pred_region
      %67 = dma.done [#allocation3], 128
    $region25: #{tpu_custom_call.1} parent=1 // pred_fallthru
      _
    // Predicated region
    $region26: #{tpu_custom_call.1} parent=1 // pred_check
      _
    $region27: #{tpu_custom_call.1} parent=1 // pred_check_branch
      %69 = sbr.rel (0) target = $region29
    $region28: #{tpu_custom_call.1} parent=1 // pred_region
      %71 = dma.done [#allocation6], 16384
    $region29: #{tpu_custom_call.1} parent=1 // pred_fallthru
      _
    // Predicated region
    $region30: #{tpu_custom_call.1} parent=1 // pred_check
      _
    $region31: #{tpu_custom_call.1} parent=1 // pred_check_branch
      %73 = sbr.rel (0) target = $region33
    $region32: #{tpu_custom_call.1} parent=1 // pred_region
      %75 = dma.done [#allocation6], 32
    $region33: #{tpu_custom_call.1} parent=1 // pred_fallthru
      _
    // Predicated region
    $region34: #{tpu_custom_call.1} parent=1 // pred_check
      _
    $region35: #{tpu_custom_call.1} parent=1 // pred_check_branch
      %77 = sbr.rel (0) target = $region37
    $region36: #{tpu_custom_call.1} parent=1 // pred_region
      %79 = dma.done [#allocation9], 6144
    $region37: #{tpu_custom_call.1} parent=1 // pred_fallthru
      _
    %v80 = vld [vmem:[#allocation2] sm:$0xff]
    %v81 = vld [vmem:[#allocation5] sm:$0xff]
    %v82 = vld [vmem:[#allocation5 + $0x8] sm:$0xff]
    %v83 = vld [vmem:[#allocation5 + $0x10] sm:$0xff]
    %v84 = vld [vmem:[#allocation5 + $0x18] sm:$0xff]
    %v85 = vld [vmem:[#allocation5 + $0x20] sm:$0xff]
    %v86 = vld [vmem:[#allocation5 + $0x28] sm:$0xff]
    %v87 = vld [vmem:[#allocation5 + $0x30] sm:$0xff]
    %v88 = vld [vmem:[#allocation5 + $0x38] sm:$0xff]
    %v89 = vld [vmem:[#allocation5 + $0x40] sm:$0xff]
    %v90 = vld [vmem:[#allocation5 + $0x48] sm:$0xff]
    %v91 = vld [vmem:[#allocation5 + $0x50] sm:$0xff]
    %v92 = vld [vmem:[#allocation5 + $0x58] sm:$0xff]
    %v93 = vld [vmem:[#allocation5 + $0x60] sm:$0xff]
    %v94 = vld [vmem:[#allocation5 + $0x68] sm:$0xff]
    %v95 = vld [vmem:[#allocation5 + $0x70] sm:$0xff]
    %v96 = vld [vmem:[#allocation5 + $0x78] sm:$0xff]
    %v97 = vld [vmem:[#allocation5 + $0x80] sm:$0xff]
    %v98 = vld [vmem:[#allocation5 + $0x88] sm:$0xff]
    %v99 = vld [vmem:[#allocation5 + $0x90] sm:$0xff]
    %v100 = vld [vmem:[#allocation5 + $0x98] sm:$0xff]
    %v101 = vld [vmem:[#allocation5 + $0xa0] sm:$0xff]
    %v102 = vld [vmem:[#allocation5 + $0xa8] sm:$0xff]
    %v103 = vld [vmem:[#allocation5 + $0xb0] sm:$0xff]
    %v104 = vld [vmem:[#allocation5 + $0xb8] sm:$0xff]
    %v105 = vld [vmem:[#allocation5 + $0xc0] sm:$0xff]
    %v106 = vld [vmem:[#allocation5 + $0xc8] sm:$0xff]
    %v107 = vld [vmem:[#allocation5 + $0xd0] sm:$0xff]
    %v108 = vld [vmem:[#allocation5 + $0xd8] sm:$0xff]
    %v109 = vld [vmem:[#allocation5 + $0xe0] sm:$0xff]
    %v110 = vld [vmem:[#allocation5 + $0xe8] sm:$0xff]
    %v111 = vld [vmem:[#allocation5 + $0xf0] sm:$0xff]
    %v112 = vld [vmem:[#allocation5 + $0xf8] sm:$0xff]
    %v113 = vld [vmem:[#allocation5 + $0x100] sm:$0xff]
    %v114 = vld [vmem:[#allocation5 + $0x108] sm:$0xff]
    %v115 = vld [vmem:[#allocation5 + $0x110] sm:$0xff]
    %v116 = vld [vmem:[#allocation5 + $0x118] sm:$0xff]
    %v117 = vld [vmem:[#allocation5 + $0x120] sm:$0xff]
    %v118 = vld [vmem:[#allocation5 + $0x128] sm:$0xff]
    %v119 = vld [vmem:[#allocation5 + $0x130] sm:$0xff]
    %v120 = vld [vmem:[#allocation5 + $0x138] sm:$0xff]
    %v121 = vld [vmem:[#allocation5 + $0x140] sm:$0xff]
    %v122 = vld [vmem:[#allocation5 + $0x148] sm:$0xff]
    %v123 = vld [vmem:[#allocation5 + $0x150] sm:$0xff]
    %v124 = vld [vmem:[#allocation5 + $0x158] sm:$0xff]
    %v125 = vld [vmem:[#allocation5 + $0x160] sm:$0xff]
    %v126 = vld [vmem:[#allocation5 + $0x168] sm:$0xff]
    %v127 = vld [vmem:[#allocation5 + $0x170] sm:$0xff]
    %v128 = vld [vmem:[#allocation5 + $0x178] sm:$0xff]
    %v129 = vld [vmem:[#allocation5 + $0x180] sm:$0xff]
    %v130 = vld [vmem:[#allocation5 + $0x188] sm:$0xff]
    %v131 = vld [vmem:[#allocation5 + $0x190] sm:$0xff]
    %v132 = vld [vmem:[#allocation5 + $0x198] sm:$0xff]
    %v133 = vld [vmem:[#allocation5 + $0x1a0] sm:$0xff]
    %v134 = vld [vmem:[#allocation5 + $0x1a8] sm:$0xff]
    %v135 = vld [vmem:[#allocation5 + $0x1b0] sm:$0xff]
    %v136 = vld [vmem:[#allocation5 + $0x1b8] sm:$0xff]
    %v137 = vld [vmem:[#allocation5 + $0x1c0] sm:$0xff]
    %v138 = vld [vmem:[#allocation5 + $0x1c8] sm:$0xff]
    %v139 = vld [vmem:[#allocation5 + $0x1d0] sm:$0xff]
    %v140 = vld [vmem:[#allocation5 + $0x1d8] sm:$0xff]
    %v141 = vld [vmem:[#allocation5 + $0x1e0] sm:$0xff]
    %v142 = vld [vmem:[#allocation5 + $0x1e8] sm:$0xff]
    %v143 = vld [vmem:[#allocation5 + $0x1f0] sm:$0xff]
    %v144 = vld [vmem:[#allocation5 + $0x1f8] sm:$0xff]
    %v145 = vld [vmem:[#allocation5 + $0x200] sm:$0xff]
    %v146 = vld [vmem:[#allocation5 + $0x208] sm:$0xff]
    %v147 = vld [vmem:[#allocation5 + $0x210] sm:$0xff]
    %v148 = vld [vmem:[#allocation5 + $0x218] sm:$0xff]
    %v149 = vld [vmem:[#allocation5 + $0x220] sm:$0xff]
    %v150 = vld [vmem:[#allocation5 + $0x228] sm:$0xff]
    %v151 = vld [vmem:[#allocation5 + $0x230] sm:$0xff]
    %v152 = vld [vmem:[#allocation5 + $0x238] sm:$0xff]
    %v153 = vld [vmem:[#allocation5 + $0x240] sm:$0xff]
    %v154 = vld [vmem:[#allocation5 + $0x248] sm:$0xff]
    %v155 = vld [vmem:[#allocation5 + $0x250] sm:$0xff]
    %v156 = vld [vmem:[#allocation5 + $0x258] sm:$0xff]
    %v157 = vld [vmem:[#allocation5 + $0x260] sm:$0xff]
    %v158 = vld [vmem:[#allocation5 + $0x268] sm:$0xff]
    %v159 = vld [vmem:[#allocation5 + $0x270] sm:$0xff]
    %v160 = vld [vmem:[#allocation5 + $0x278] sm:$0xff]
    %v161 = vld [vmem:[#allocation5 + $0x280] sm:$0xff]
    %v162 = vld [vmem:[#allocation5 + $0x288] sm:$0xff]
    %v163 = vld [vmem:[#allocation5 + $0x290] sm:$0xff]
    %v164 = vld [vmem:[#allocation5 + $0x298] sm:$0xff]
    %v165 = vld [vmem:[#allocation5 + $0x2a0] sm:$0xff]
    %v166 = vld [vmem:[#allocation5 + $0x2a8] sm:$0xff]
    %v167 = vld [vmem:[#allocation5 + $0x2b0] sm:$0xff]
    %v168 = vld [vmem:[#allocation5 + $0x2b8] sm:$0xff]
    %v169 = vld [vmem:[#allocation5 + $0x2c0] sm:$0xff]
    %v170 = vld [vmem:[#allocation5 + $0x2c8] sm:$0xff]
    %v171 = vld [vmem:[#allocation5 + $0x2d0] sm:$0xff]
    %v172 = vld [vmem:[#allocation5 + $0x2d8] sm:$0xff]
    %v173 = vld [vmem:[#allocation5 + $0x2e0] sm:$0xff]
    %v174 = vld [vmem:[#allocation5 + $0x2e8] sm:$0xff]
    %v175 = vld [vmem:[#allocation5 + $0x2f0] sm:$0xff]
    %v176 = vld [vmem:[#allocation5 + $0x2f8] sm:$0xff]
    %v177 = vld [vmem:[#allocation5 + $0x300] sm:$0xff]
    %v178 = vld [vmem:[#allocation5 + $0x308] sm:$0xff]
    %v179 = vld [vmem:[#allocation5 + $0x310] sm:$0xff]
    %v180 = vld [vmem:[#allocation5 + $0x318] sm:$0xff]
    %v181 = vld [vmem:[#allocation5 + $0x320] sm:$0xff]
    %v182 = vld [vmem:[#allocation5 + $0x328] sm:$0xff]
    %v183 = vld [vmem:[#allocation5 + $0x330] sm:$0xff]
    %v184 = vld [vmem:[#allocation5 + $0x338] sm:$0xff]
    %v185 = vld [vmem:[#allocation5 + $0x340] sm:$0xff]
    %v186 = vld [vmem:[#allocation5 + $0x348] sm:$0xff]
    %v187 = vld [vmem:[#allocation5 + $0x350] sm:$0xff]
    %v188 = vld [vmem:[#allocation5 + $0x358] sm:$0xff]
    %v189 = vld [vmem:[#allocation5 + $0x360] sm:$0xff]
    %v190 = vld [vmem:[#allocation5 + $0x368] sm:$0xff]
    %v191 = vld [vmem:[#allocation5 + $0x370] sm:$0xff]
    %v192 = vld [vmem:[#allocation5 + $0x378] sm:$0xff]
    %v193 = vld [vmem:[#allocation5 + $0x380] sm:$0xff]
    %v194 = vld [vmem:[#allocation5 + $0x388] sm:$0xff]
    %v195 = vld [vmem:[#allocation5 + $0x390] sm:$0xff]
    %v196 = vld [vmem:[#allocation5 + $0x398] sm:$0xff]
    %v197 = vld [vmem:[#allocation5 + $0x3a0] sm:$0xff]
    %v198 = vld [vmem:[#allocation5 + $0x3a8] sm:$0xff]
    %v199 = vld [vmem:[#allocation5 + $0x3b0] sm:$0xff]
    %v200 = vld [vmem:[#allocation5 + $0x3b8] sm:$0xff]
    %v201 = vld [vmem:[#allocation5 + $0x3c0] sm:$0xff]
    %v202 = vld [vmem:[#allocation5 + $0x3c8] sm:$0xff]
    %v203 = vld [vmem:[#allocation5 + $0x3d0] sm:$0xff]
    %v204 = vld [vmem:[#allocation5 + $0x3d8] sm:$0xff]
    %v205 = vld [vmem:[#allocation5 + $0x3e0] sm:$0xff]
    %v206 = vld [vmem:[#allocation5 + $0x3e8] sm:$0xff]
    %v207 = vld [vmem:[#allocation5 + $0x3f0] sm:$0xff]
    %v208 = vld [vmem:[#allocation5 + $0x3f8] sm:$0xff]
    %v209 = vld [vmem:[#allocation7] sm:$0x3]
    %v211 = vperm.slane %v209, 0
    %v212 = vperm.slane %v209, 1
    %216 = vst [vmem:[#allocation1] ss:$9 sm:$0xff] %v80
    %v217 = vld [vmem:[#allocation1] sm:$0xff]
    %v218 = vld [vmem:[#allocation1 + $0x9] sm:$0xff]
    %v219 = vld [vmem:[#allocation1 + $0x12] sm:$0xff]
    %v220 = vld [vmem:[#allocation1 + $0x1b] sm:$0xff]
    %v221 = vld [vmem:[#allocation1 + $0x24] sm:$0xff]
    %v222 = vld [vmem:[#allocation1 + $0x2d] sm:$0xff]
    %v223 = vld [vmem:[#allocation1 + $0x36] sm:$0xff]
    %v224 = vld [vmem:[#allocation1 + $0x3f] sm:$0xff]
    %v361 = vunpack.c.l.b16 %v81
    %v362 = vunpack.c.h.b16 %v81
    %v363 = vunpack.c.l.b16 %v82
    %v364 = vunpack.c.h.b16 %v82
    %v365 = vunpack.c.l.b16 %v83
    %v366 = vunpack.c.h.b16 %v83
    %v367 = vunpack.c.l.b16 %v84
    %v368 = vunpack.c.h.b16 %v84
    %v369 = vunpack.c.l.b16 %v85
    %v370 = vunpack.c.h.b16 %v85
    %v371 = vunpack.c.l.b16 %v86
    %v372 = vunpack.c.h.b16 %v86
    %v373 = vunpack.c.l.b16 %v87
    %v374 = vunpack.c.h.b16 %v87
    %v375 = vunpack.c.l.b16 %v88
    %v376 = vunpack.c.h.b16 %v88
    %v377 = vunpack.c.l.b16 %v89
    %v378 = vunpack.c.h.b16 %v89
    %v379 = vunpack.c.l.b16 %v90
    %v380 = vunpack.c.h.b16 %v90
    %v381 = vunpack.c.l.b16 %v91
    %v382 = vunpack.c.h.b16 %v91
    %v383 = vunpack.c.l.b16 %v92
    %v384 = vunpack.c.h.b16 %v92
    %v385 = vunpack.c.l.b16 %v93
    %v386 = vunpack.c.h.b16 %v93
    %v387 = vunpack.c.l.b16 %v94
    %v388 = vunpack.c.h.b16 %v94
    %v389 = vunpack.c.l.b16 %v95
    %v390 = vunpack.c.h.b16 %v95
    %v391 = vunpack.c.l.b16 %v96
    %v392 = vunpack.c.h.b16 %v96
    %v393 = vunpack.c.l.b16 %v97
    %v394 = vunpack.c.h.b16 %v97
    %v395 = vunpack.c.l.b16 %v98
    %v396 = vunpack.c.h.b16 %v98
    %v397 = vunpack.c.l.b16 %v99
    %v398 = vunpack.c.h.b16 %v99
    %v399 = vunpack.c.l.b16 %v100
    %v400 = vunpack.c.h.b16 %v100
    %v401 = vunpack.c.l.b16 %v101
    %v402 = vunpack.c.h.b16 %v101
    %v403 = vunpack.c.l.b16 %v102
    %v404 = vunpack.c.h.b16 %v102
    %v405 = vunpack.c.l.b16 %v103
    %v406 = vunpack.c.h.b16 %v103
    %v407 = vunpack.c.l.b16 %v104
    %v408 = vunpack.c.h.b16 %v104
    %v409 = vunpack.c.l.b16 %v105
    %v410 = vunpack.c.h.b16 %v105
    %v411 = vunpack.c.l.b16 %v106
    %v412 = vunpack.c.h.b16 %v106
    %v413 = vunpack.c.l.b16 %v107
    %v414 = vunpack.c.h.b16 %v107
    %v415 = vunpack.c.l.b16 %v108
    %v416 = vunpack.c.h.b16 %v108
    %v417 = vunpack.c.l.b16 %v109
    %v418 = vunpack.c.h.b16 %v109
    %v419 = vunpack.c.l.b16 %v110
    %v420 = vunpack.c.h.b16 %v110
    %v421 = vunpack.c.l.b16 %v111
    %v422 = vunpack.c.h.b16 %v111
    %v423 = vunpack.c.l.b16 %v112
    %v424 = vunpack.c.h.b16 %v112
    %v425 = vunpack.c.l.b16 %v113
    %v426 = vunpack.c.h.b16 %v113
    %v427 = vunpack.c.l.b16 %v114
    %v428 = vunpack.c.h.b16 %v114
    %v429 = vunpack.c.l.b16 %v115
    %v430 = vunpack.c.h.b16 %v115
    %v431 = vunpack.c.l.b16 %v116
    %v432 = vunpack.c.h.b16 %v116
    %v433 = vunpack.c.l.b16 %v117
    %v434 = vunpack.c.h.b16 %v117
    %v435 = vunpack.c.l.b16 %v118
    %v436 = vunpack.c.h.b16 %v118
    %v437 = vunpack.c.l.b16 %v119
    %v438 = vunpack.c.h.b16 %v119
    %v439 = vunpack.c.l.b16 %v120
    %v440 = vunpack.c.h.b16 %v120
    %v441 = vunpack.c.l.b16 %v121
    %v442 = vunpack.c.h.b16 %v121
    %v443 = vunpack.c.l.b16 %v122
    %v444 = vunpack.c.h.b16 %v122
    %v445 = vunpack.c.l.b16 %v123
    %v446 = vunpack.c.h.b16 %v123
    %v447 = vunpack.c.l.b16 %v124
    %v448 = vunpack.c.h.b16 %v124
    %v449 = vunpack.c.l.b16 %v125
    %v450 = vunpack.c.h.b16 %v125
    %v451 = vunpack.c.l.b16 %v126
    %v452 = vunpack.c.h.b16 %v126
    %v453 = vunpack.c.l.b16 %v127
    %v454 = vunpack.c.h.b16 %v127
    %v455 = vunpack.c.l.b16 %v128
    %v456 = vunpack.c.h.b16 %v128
    %v457 = vunpack.c.l.b16 %v129
    %v458 = vunpack.c.h.b16 %v129
    %v459 = vunpack.c.l.b16 %v130
    %v460 = vunpack.c.h.b16 %v130
    %v461 = vunpack.c.l.b16 %v131
    %v462 = vunpack.c.h.b16 %v131
    %v463 = vunpack.c.l.b16 %v132
    %v464 = vunpack.c.h.b16 %v132
    %v465 = vunpack.c.l.b16 %v133
    %v466 = vunpack.c.h.b16 %v133
    %v467 = vunpack.c.l.b16 %v134
    %v468 = vunpack.c.h.b16 %v134
    %v469 = vunpack.c.l.b16 %v135
    %v470 = vunpack.c.h.b16 %v135
    %v471 = vunpack.c.l.b16 %v136
    %v472 = vunpack.c.h.b16 %v136
    %v473 = vunpack.c.l.b16 %v137
    %v474 = vunpack.c.h.b16 %v137
    %v475 = vunpack.c.l.b16 %v138
    %v476 = vunpack.c.h.b16 %v138
    %v477 = vunpack.c.l.b16 %v139
    %v478 = vunpack.c.h.b16 %v139
    %v479 = vunpack.c.l.b16 %v140
    %v480 = vunpack.c.h.b16 %v140
    %v481 = vunpack.c.l.b16 %v141
    %v482 = vunpack.c.h.b16 %v141
    %v483 = vunpack.c.l.b16 %v142
    %v484 = vunpack.c.h.b16 %v142
    %v485 = vunpack.c.l.b16 %v143
    %v486 = vunpack.c.h.b16 %v143
    %v487 = vunpack.c.l.b16 %v144
    %v488 = vunpack.c.h.b16 %v144
    %v489 = vunpack.c.l.b16 %v145
    %v490 = vunpack.c.h.b16 %v145
    %v491 = vunpack.c.l.b16 %v146
    %v492 = vunpack.c.h.b16 %v146
    %v493 = vunpack.c.l.b16 %v147
    %v494 = vunpack.c.h.b16 %v147
    %v495 = vunpack.c.l.b16 %v148
    %v496 = vunpack.c.h.b16 %v148
    %v497 = vunpack.c.l.b16 %v149
    %v498 = vunpack.c.h.b16 %v149
    %v499 = vunpack.c.l.b16 %v150
    %v500 = vunpack.c.h.b16 %v150
    %v501 = vunpack.c.l.b16 %v151
    %v502 = vunpack.c.h.b16 %v151
    %v503 = vunpack.c.l.b16 %v152
    %v504 = vunpack.c.h.b16 %v152
    %v505 = vunpack.c.l.b16 %v153
    %v506 = vunpack.c.h.b16 %v153
    %v507 = vunpack.c.l.b16 %v154
    %v508 = vunpack.c.h.b16 %v154
    %v509 = vunpack.c.l.b16 %v155
    %v510 = vunpack.c.h.b16 %v155
    %v511 = vunpack.c.l.b16 %v156
    %v512 = vunpack.c.h.b16 %v156
    %v513 = vunpack.c.l.b16 %v157
    %v514 = vunpack.c.h.b16 %v157
    %v515 = vunpack.c.l.b16 %v158
    %v516 = vunpack.c.h.b16 %v158
    %v517 = vunpack.c.l.b16 %v159
    %v518 = vunpack.c.h.b16 %v159
    %v519 = vunpack.c.l.b16 %v160
    %v520 = vunpack.c.h.b16 %v160
    %v521 = vunpack.c.l.b16 %v161
    %v522 = vunpack.c.h.b16 %v161
    %v523 = vunpack.c.l.b16 %v162
    %v524 = vunpack.c.h.b16 %v162
    %v525 = vunpack.c.l.b16 %v163
    %v526 = vunpack.c.h.b16 %v163
    %v527 = vunpack.c.l.b16 %v164
    %v528 = vunpack.c.h.b16 %v164
    %v529 = vunpack.c.l.b16 %v165
    %v530 = vunpack.c.h.b16 %v165
    %v531 = vunpack.c.l.b16 %v166
    %v532 = vunpack.c.h.b16 %v166
    %v533 = vunpack.c.l.b16 %v167
    %v534 = vunpack.c.h.b16 %v167
    %v535 = vunpack.c.l.b16 %v168
    %v536 = vunpack.c.h.b16 %v168
    %v537 = vunpack.c.l.b16 %v169
    %v538 = vunpack.c.h.b16 %v169
    %v539 = vunpack.c.l.b16 %v170
    %v540 = vunpack.c.h.b16 %v170
    %v541 = vunpack.c.l.b16 %v171
    %v542 = vunpack.c.h.b16 %v171
    %v543 = vunpack.c.l.b16 %v172
    %v544 = vunpack.c.h.b16 %v172
    %v545 = vunpack.c.l.b16 %v173
    %v546 = vunpack.c.h.b16 %v173
    %v547 = vunpack.c.l.b16 %v174
    %v548 = vunpack.c.h.b16 %v174
    %v549 = vunpack.c.l.b16 %v175
    %v550 = vunpack.c.h.b16 %v175
    %v551 = vunpack.c.l.b16 %v176
    %v552 = vunpack.c.h.b16 %v176
    %v553 = vunpack.c.l.b16 %v177
    %v554 = vunpack.c.h.b16 %v177
    %v555 = vunpack.c.l.b16 %v178
    %v556 = vunpack.c.h.b16 %v178
    %v557 = vunpack.c.l.b16 %v179
    %v558 = vunpack.c.h.b16 %v179
    %v559 = vunpack.c.l.b16 %v180
    %v560 = vunpack.c.h.b16 %v180
    %v561 = vunpack.c.l.b16 %v181
    %v562 = vunpack.c.h.b16 %v181
    %v563 = vunpack.c.l.b16 %v182
    %v564 = vunpack.c.h.b16 %v182
    %v565 = vunpack.c.l.b16 %v183
    %v566 = vunpack.c.h.b16 %v183
    %v567 = vunpack.c.l.b16 %v184
    %v568 = vunpack.c.h.b16 %v184
    %v569 = vunpack.c.l.b16 %v185
    %v570 = vunpack.c.h.b16 %v185
    %v571 = vunpack.c.l.b16 %v186
    %v572 = vunpack.c.h.b16 %v186
    %v573 = vunpack.c.l.b16 %v187
    %v574 = vunpack.c.h.b16 %v187
    %v575 = vunpack.c.l.b16 %v188
    %v576 = vunpack.c.h.b16 %v188
    %v577 = vunpack.c.l.b16 %v189
    %v578 = vunpack.c.h.b16 %v189
    %v579 = vunpack.c.l.b16 %v190
    %v580 = vunpack.c.h.b16 %v190
    %v581 = vunpack.c.l.b16 %v191
    %v582 = vunpack.c.h.b16 %v191
    %v583 = vunpack.c.l.b16 %v192
    %v584 = vunpack.c.h.b16 %v192
    %v585 = vunpack.c.l.b16 %v193
    %v586 = vunpack.c.h.b16 %v193
    %v587 = vunpack.c.l.b16 %v194
    %v588 = vunpack.c.h.b16 %v194
    %v589 = vunpack.c.l.b16 %v195
    %v590 = vunpack.c.h.b16 %v195
    %v591 = vunpack.c.l.b16 %v196
    %v592 = vunpack.c.h.b16 %v196
    %v593 = vunpack.c.l.b16 %v197
    %v594 = vunpack.c.h.b16 %v197
    %v595 = vunpack.c.l.b16 %v198
    %v596 = vunpack.c.h.b16 %v198
    %v597 = vunpack.c.l.b16 %v199
    %v598 = vunpack.c.h.b16 %v199
    %v599 = vunpack.c.l.b16 %v200
    %v600 = vunpack.c.h.b16 %v200
    %v601 = vunpack.c.l.b16 %v201
    %v602 = vunpack.c.h.b16 %v201
    %v603 = vunpack.c.l.b16 %v202
    %v604 = vunpack.c.h.b16 %v202
    %v605 = vunpack.c.l.b16 %v203
    %v606 = vunpack.c.h.b16 %v203
    %v607 = vunpack.c.l.b16 %v204
    %v608 = vunpack.c.h.b16 %v204
    %v609 = vunpack.c.l.b16 %v205
    %v610 = vunpack.c.h.b16 %v205
    %v611 = vunpack.c.l.b16 %v206
    %v612 = vunpack.c.h.b16 %v206
    %v613 = vunpack.c.l.b16 %v207
    %v614 = vunpack.c.h.b16 %v207
    %v615 = vunpack.c.l.b16 %v208
    %v616 = vunpack.c.h.b16 %v208
    %v617 = vpack.c.b16 %v363, %v361
    %v618 = vpack.c.b16 %v364, %v362
    %v619 = vpack.c.b16 %v367, %v365
    %v620 = vpack.c.b16 %v368, %v366
    %v621 = vpack.c.b16 %v371, %v369
    %v622 = vpack.c.b16 %v372, %v370
    %v623 = vpack.c.b16 %v375, %v373
    %v624 = vpack.c.b16 %v376, %v374
    %v625 = vpack.c.b16 %v379, %v377
    %v626 = vpack.c.b16 %v380, %v378
    %v627 = vpack.c.b16 %v383, %v381
    %v628 = vpack.c.b16 %v384, %v382
    %v629 = vpack.c.b16 %v387, %v385
    %v630 = vpack.c.b16 %v388, %v386
    %v631 = vpack.c.b16 %v391, %v389
    %v632 = vpack.c.b16 %v392, %v390
    %v633 = vpack.c.b16 %v395, %v393
    %v634 = vpack.c.b16 %v396, %v394
    %v635 = vpack.c.b16 %v399, %v397
    %v636 = vpack.c.b16 %v400, %v398
    %v637 = vpack.c.b16 %v403, %v401
    %v638 = vpack.c.b16 %v404, %v402
    %v639 = vpack.c.b16 %v407, %v405
    %v640 = vpack.c.b16 %v408, %v406
    %v641 = vpack.c.b16 %v411, %v409
    %v642 = vpack.c.b16 %v412, %v410
    %v643 = vpack.c.b16 %v415, %v413
    %v644 = vpack.c.b16 %v416, %v414
    %v645 = vpack.c.b16 %v419, %v417
    %v646 = vpack.c.b16 %v420, %v418
    %v647 = vpack.c.b16 %v423, %v421
    %v648 = vpack.c.b16 %v424, %v422
    %v649 = vpack.c.b16 %v427, %v425
    %v650 = vpack.c.b16 %v428, %v426
    %v651 = vpack.c.b16 %v431, %v429
    %v652 = vpack.c.b16 %v432, %v430
    %v653 = vpack.c.b16 %v435, %v433
    %v654 = vpack.c.b16 %v436, %v434
    %v655 = vpack.c.b16 %v439, %v437
    %v656 = vpack.c.b16 %v440, %v438
    %v657 = vpack.c.b16 %v443, %v441
    %v658 = vpack.c.b16 %v444, %v442
    %v659 = vpack.c.b16 %v447, %v445
    %v660 = vpack.c.b16 %v448, %v446
    %v661 = vpack.c.b16 %v451, %v449
    %v662 = vpack.c.b16 %v452, %v450
    %v663 = vpack.c.b16 %v455, %v453
    %v664 = vpack.c.b16 %v456, %v454
    %v665 = vpack.c.b16 %v459, %v457
    %v666 = vpack.c.b16 %v460, %v458
    %v667 = vpack.c.b16 %v463, %v461
    %v668 = vpack.c.b16 %v464, %v462
    %v669 = vpack.c.b16 %v467, %v465
    %v670 = vpack.c.b16 %v468, %v466
    %v671 = vpack.c.b16 %v471, %v469
    %v672 = vpack.c.b16 %v472, %v470
    %v673 = vpack.c.b16 %v475, %v473
    %v674 = vpack.c.b16 %v476, %v474
    %v675 = vpack.c.b16 %v479, %v477
    %v676 = vpack.c.b16 %v480, %v478
    %v677 = vpack.c.b16 %v483, %v481
    %v678 = vpack.c.b16 %v484, %v482
    %v679 = vpack.c.b16 %v487, %v485
    %v680 = vpack.c.b16 %v488, %v486
    %v681 = vpack.c.b16 %v491, %v489
    %v682 = vpack.c.b16 %v492, %v490
    %v683 = vpack.c.b16 %v495, %v493
    %v684 = vpack.c.b16 %v496, %v494
    %v685 = vpack.c.b16 %v499, %v497
    %v686 = vpack.c.b16 %v500, %v498
    %v687 = vpack.c.b16 %v503, %v501
    %v688 = vpack.c.b16 %v504, %v502
    %v689 = vpack.c.b16 %v507, %v505
    %v690 = vpack.c.b16 %v508, %v506
    %v691 = vpack.c.b16 %v511, %v509
    %v692 = vpack.c.b16 %v512, %v510
    %v693 = vpack.c.b16 %v515, %v513
    %v694 = vpack.c.b16 %v516, %v514
    %v695 = vpack.c.b16 %v519, %v517
    %v696 = vpack.c.b16 %v520, %v518
    %v697 = vpack.c.b16 %v523, %v521
    %v698 = vpack.c.b16 %v524, %v522
    %v699 = vpack.c.b16 %v527, %v525
    %v700 = vpack.c.b16 %v528, %v526
    %v701 = vpack.c.b16 %v531, %v529
    %v702 = vpack.c.b16 %v532, %v530
    %v703 = vpack.c.b16 %v535, %v533
    %v704 = vpack.c.b16 %v536, %v534
    %v705 = vpack.c.b16 %v539, %v537
    %v706 = vpack.c.b16 %v540, %v538
    %v707 = vpack.c.b16 %v543, %v541
    %v708 = vpack.c.b16 %v544, %v542
    %v709 = vpack.c.b16 %v547, %v545
    %v710 = vpack.c.b16 %v548, %v546
    %v711 = vpack.c.b16 %v551, %v549
    %v712 = vpack.c.b16 %v552, %v550
    %v713 = vpack.c.b16 %v555, %v553
    %v714 = vpack.c.b16 %v556, %v554
    %v715 = vpack.c.b16 %v559, %v557
    %v716 = vpack.c.b16 %v560, %v558
    %v717 = vpack.c.b16 %v563, %v561
    %v718 = vpack.c.b16 %v564, %v562
    %v719 = vpack.c.b16 %v567, %v565
    %v720 = vpack.c.b16 %v568, %v566
    %v721 = vpack.c.b16 %v571, %v569
    %v722 = vpack.c.b16 %v572, %v570
    %v723 = vpack.c.b16 %v575, %v573
    %v724 = vpack.c.b16 %v576, %v574
    %v725 = vpack.c.b16 %v579, %v577
    %v726 = vpack.c.b16 %v580, %v578
    %v727 = vpack.c.b16 %v583, %v581
    %v728 = vpack.c.b16 %v584, %v582
    %v729 = vpack.c.b16 %v587, %v585
    %v730 = vpack.c.b16 %v588, %v586
    %v731 = vpack.c.b16 %v591, %v589
    %v732 = vpack.c.b16 %v592, %v590
    %v733 = vpack.c.b16 %v595, %v593
    %v734 = vpack.c.b16 %v596, %v594
    %v735 = vpack.c.b16 %v599, %v597
    %v736 = vpack.c.b16 %v600, %v598
    %v737 = vpack.c.b16 %v603, %v601
    %v738 = vpack.c.b16 %v604, %v602
    %v739 = vpack.c.b16 %v607, %v605
    %v740 = vpack.c.b16 %v608, %v606
    %v741 = vpack.c.b16 %v611, %v609
    %v742 = vpack.c.b16 %v612, %v610
    %v743 = vpack.c.b16 %v615, %v613
    %v744 = vpack.c.b16 %v616, %v614
    %873 = vmatpush.bf16.msra.mxu0 %v631
    %874 = vmatpush.bf16.msra.mxu0 %v629
    %875 = vmatpush.bf16.msra.mxu0 %v627
    %876 = vmatpush.bf16.msra.mxu0 %v625
    %877 = vmatpush.bf16.msra.mxu0 %v623
    %878 = vmatpush.bf16.msra.mxu0 %v621
    %879 = vmatpush.bf16.msra.mxu0 %v619
    %880 = vmatpush.bf16.msra.mxu0 %v617
    %881 = vmatmul.bf16.gmra.mxu0 %v217
    %v882 = vpop.f32.mrf.mxu0
    %v883 = vadd.f32 %v211, %v882
    %v884 = vpop.f32.mrf.mxu0
    %885 = vdwg.mxu0
    %886 = vmatpush.bf16.msra.mxu0 %v647
    %887 = vmatpush.bf16.msra.mxu0 %v645
    %888 = vmatpush.bf16.msra.mxu0 %v643
    %889 = vmatpush.bf16.msra.mxu0 %v641
    %890 = vmatpush.bf16.msra.mxu0 %v639
    %891 = vmatpush.bf16.msra.mxu0 %v637
    %892 = vmatpush.bf16.msra.mxu0 %v635
    %893 = vmatpush.bf16.msra.mxu0 %v633
    %894 = vmatmul.bf16.gmra.mxu0 %v218
    %v895 = vpop.f32.mrf.mxu0
    %v896 = vadd.f32 %v883, %v895
    %v897 = vpop.f32.mrf.mxu0
    %898 = vdwg.mxu0
    %899 = vmatpush.bf16.msra.mxu0 %v663
    %900 = vmatpush.bf16.msra.mxu0 %v661
    %901 = vmatpush.bf16.msra.mxu0 %v659
    %902 = vmatpush.bf16.msra.mxu0 %v657
    %903 = vmatpush.bf16.msra.mxu0 %v655
    %904 = vmatpush.bf16.msra.mxu0 %v653
    %905 = vmatpush.bf16.msra.mxu0 %v651
    %906 = vmatpush.bf16.msra.mxu0 %v649
    %907 = vmatmul.bf16.gmra.mxu0 %v219
    %v908 = vpop.f32.mrf.mxu0
    %v909 = vadd.f32 %v896, %v908
    %v910 = vpop.f32.mrf.mxu0
    %911 = vdwg.mxu0
    %912 = vmatpush.bf16.msra.mxu0 %v679
    %913 = vmatpush.bf16.msra.mxu0 %v677
    %914 = vmatpush.bf16.msra.mxu0 %v675
    %915 = vmatpush.bf16.msra.mxu0 %v673
    %916 = vmatpush.bf16.msra.mxu0 %v671
    %917 = vmatpush.bf16.msra.mxu0 %v669
    %918 = vmatpush.bf16.msra.mxu0 %v667
    %919 = vmatpush.bf16.msra.mxu0 %v665
    %920 = vmatmul.bf16.gmra.mxu0 %v220
    %v921 = vpop.f32.mrf.mxu0
    %v922 = vadd.f32 %v909, %v921
    %v923 = vpop.f32.mrf.mxu0
    %924 = vdwg.mxu0
    %925 = vmatpush.bf16.msra.mxu0 %v695
    %926 = vmatpush.bf16.msra.mxu0 %v693
    %927 = vmatpush.bf16.msra.mxu0 %v691
    %928 = vmatpush.bf16.msra.mxu0 %v689
    %929 = vmatpush.bf16.msra.mxu0 %v687
    %930 = vmatpush.bf16.msra.mxu0 %v685
    %931 = vmatpush.bf16.msra.mxu0 %v683
    %932 = vmatpush.bf16.msra.mxu0 %v681
    %933 = vmatmul.bf16.gmra.mxu0 %v221
    %v934 = vpop.f32.mrf.mxu0
    %v935 = vadd.f32 %v922, %v934
    %v936 = vpop.f32.mrf.mxu0
    %937 = vdwg.mxu0
    %938 = vmatpush.bf16.msra.mxu0 %v711
    %939 = vmatpush.bf16.msra.mxu0 %v709
    %940 = vmatpush.bf16.msra.mxu0 %v707
    %941 = vmatpush.bf16.msra.mxu0 %v705
    %942 = vmatpush.bf16.msra.mxu0 %v703
    %943 = vmatpush.bf16.msra.mxu0 %v701
    %944 = vmatpush.bf16.msra.mxu0 %v699
    %945 = vmatpush.bf16.msra.mxu0 %v697
    %946 = vmatmul.bf16.gmra.mxu0 %v222
    %v947 = vpop.f32.mrf.mxu0
    %v948 = vadd.f32 %v935, %v947
    %v949 = vpop.f32.mrf.mxu0
    %950 = vdwg.mxu0
    %951 = vmatpush.bf16.msra.mxu0 %v727
    %952 = vmatpush.bf16.msra.mxu0 %v725
    %953 = vmatpush.bf16.msra.mxu0 %v723
    %954 = vmatpush.bf16.msra.mxu0 %v721
    %955 = vmatpush.bf16.msra.mxu0 %v719
    %956 = vmatpush.bf16.msra.mxu0 %v717
    %957 = vmatpush.bf16.msra.mxu0 %v715
    %958 = vmatpush.bf16.msra.mxu0 %v713
    %959 = vmatmul.bf16.gmra.mxu0 %v223
    %v960 = vpop.f32.mrf.mxu0
    %v961 = vadd.f32 %v948, %v960
    %v962 = vpop.f32.mrf.mxu0
    %963 = vdwg.mxu0
    %964 = vmatpush.bf16.msra.mxu0 %v743
    %965 = vmatpush.bf16.msra.mxu0 %v741
    %966 = vmatpush.bf16.msra.mxu0 %v739
    %967 = vmatpush.bf16.msra.mxu0 %v737
    %968 = vmatpush.bf16.msra.mxu0 %v735
    %969 = vmatpush.bf16.msra.mxu0 %v733
    %970 = vmatpush.bf16.msra.mxu0 %v731
    %971 = vmatpush.bf16.msra.mxu0 %v729
    %972 = vmatmul.bf16.gmra.mxu0 %v224
    %v973 = vpop.f32.mrf.mxu0
    %v974 = vadd.f32 %v961, %v973
    %v975 = vpop.f32.mrf.mxu0
    %976 = vdwg.mxu0
    %977 = vmatpush.bf16.msra.mxu0 %v632
    %978 = vmatpush.bf16.msra.mxu0 %v630
    %979 = vmatpush.bf16.msra.mxu0 %v628
    %980 = vmatpush.bf16.msra.mxu0 %v626
    %981 = vmatpush.bf16.msra.mxu0 %v624
    %982 = vmatpush.bf16.msra.mxu0 %v622
    %983 = vmatpush.bf16.msra.mxu0 %v620
    %984 = vmatpush.bf16.msra.mxu0 %v618
    %985 = vmatmul.bf16.gmra.mxu0 %v217
    %v986 = vpop.f32.mrf.mxu0
    %v987 = vadd.f32 %v212, %v986
    %v988 = vpop.f32.mrf.mxu0
    %989 = vdwg.mxu0
    %990 = vmatpush.bf16.msra.mxu0 %v648
    %991 = vmatpush.bf16.msra.mxu0 %v646
    %992 = vmatpush.bf16.msra.mxu0 %v644
    %993 = vmatpush.bf16.msra.mxu0 %v642
    %994 = vmatpush.bf16.msra.mxu0 %v640
    %995 = vmatpush.bf16.msra.mxu0 %v638
    %996 = vmatpush.bf16.msra.mxu0 %v636
    %997 = vmatpush.bf16.msra.mxu0 %v634
    %998 = vmatmul.bf16.gmra.mxu0 %v218
    %v999 = vpop.f32.mrf.mxu0
    %v1000 = vadd.f32 %v987, %v999
    %v1001 = vpop.f32.mrf.mxu0
    %1002 = vdwg.mxu0
    %1003 = vmatpush.bf16.msra.mxu0 %v664
    %1004 = vmatpush.bf16.msra.mxu0 %v662
    %1005 = vmatpush.bf16.msra.mxu0 %v660
    %1006 = vmatpush.bf16.msra.mxu0 %v658
    %1007 = vmatpush.bf16.msra.mxu0 %v656
    %1008 = vmatpush.bf16.msra.mxu0 %v654
    %1009 = vmatpush.bf16.msra.mxu0 %v652
    %1010 = vmatpush.bf16.msra.mxu0 %v650
    %1011 = vmatmul.bf16.gmra.mxu0 %v219
    %v1012 = vpop.f32.mrf.mxu0
    %v1013 = vadd.f32 %v1000, %v1012
    %v1014 = vpop.f32.mrf.mxu0
    %1015 = vdwg.mxu0
    %1016 = vmatpush.bf16.msra.mxu0 %v680
    %1017 = vmatpush.bf16.msra.mxu0 %v678
    %1018 = vmatpush.bf16.msra.mxu0 %v676
    %1019 = vmatpush.bf16.msra.mxu0 %v674
    %1020 = vmatpush.bf16.msra.mxu0 %v672
    %1021 = vmatpush.bf16.msra.mxu0 %v670
    %1022 = vmatpush.bf16.msra.mxu0 %v668
    %1023 = vmatpush.bf16.msra.mxu0 %v666
    %1024 = vmatmul.bf16.gmra.mxu0 %v220
    %v1025 = vpop.f32.mrf.mxu0
    %v1026 = vadd.f32 %v1013, %v1025
    %v1027 = vpop.f32.mrf.mxu0
    %1028 = vdwg.mxu0
    %1029 = vmatpush.bf16.msra.mxu0 %v696
    %1030 = vmatpush.bf16.msra.mxu0 %v694
    %1031 = vmatpush.bf16.msra.mxu0 %v692
    %1032 = vmatpush.bf16.msra.mxu0 %v690
    %1033 = vmatpush.bf16.msra.mxu0 %v688
    %1034 = vmatpush.bf16.msra.mxu0 %v686
    %1035 = vmatpush.bf16.msra.mxu0 %v684
    %1036 = vmatpush.bf16.msra.mxu0 %v682
    %1037 = vmatmul.bf16.gmra.mxu0 %v221
    %v1038 = vpop.f32.mrf.mxu0
    %v1039 = vadd.f32 %v1026, %v1038
    %v1040 = vpop.f32.mrf.mxu0
    %1041 = vdwg.mxu0
    %1042 = vmatpush.bf16.msra.mxu0 %v712
    %1043 = vmatpush.bf16.msra.mxu0 %v710
    %1044 = vmatpush.bf16.msra.mxu0 %v708
    %1045 = vmatpush.bf16.msra.mxu0 %v706
    %1046 = vmatpush.bf16.msra.mxu0 %v704
    %1047 = vmatpush.bf16.msra.mxu0 %v702
    %1048 = vmatpush.bf16.msra.mxu0 %v700
    %1049 = vmatpush.bf16.msra.mxu0 %v698
    %1050 = vmatmul.bf16.gmra.mxu0 %v222
    %v1051 = vpop.f32.mrf.mxu0
    %v1052 = vadd.f32 %v1039, %v1051
    %v1053 = vpop.f32.mrf.mxu0
    %1054 = vdwg.mxu0
    %1055 = vmatpush.bf16.msra.mxu0 %v728
    %1056 = vmatpush.bf16.msra.mxu0 %v726
    %1057 = vmatpush.bf16.msra.mxu0 %v724
    %1058 = vmatpush.bf16.msra.mxu0 %v722
    %1059 = vmatpush.bf16.msra.mxu0 %v720
    %1060 = vmatpush.bf16.msra.mxu0 %v718
    %1061 = vmatpush.bf16.msra.mxu0 %v716
    %1062 = vmatpush.bf16.msra.mxu0 %v714
    %1063 = vmatmul.bf16.gmra.mxu0 %v223
    %v1064 = vpop.f32.mrf.mxu0
    %v1065 = vadd.f32 %v1052, %v1064
    %v1066 = vpop.f32.mrf.mxu0
    %1067 = vdwg.mxu0
    %1068 = vmatpush.bf16.msra.mxu0 %v744
    %1069 = vmatpush.bf16.msra.mxu0 %v742
    %1070 = vmatpush.bf16.msra.mxu0 %v740
    %1071 = vmatpush.bf16.msra.mxu0 %v738
    %1072 = vmatpush.bf16.msra.mxu0 %v736
    %1073 = vmatpush.bf16.msra.mxu0 %v734
    %1074 = vmatpush.bf16.msra.mxu0 %v732
    %1075 = vmatpush.bf16.msra.mxu0 %v730
    %1076 = vmatmul.bf16.gmra.mxu0 %v224
    %v1077 = vpop.f32.mrf.mxu0
    %v1078 = vadd.f32 %v1065, %v1077
    %v1079 = vpop.f32.mrf.mxu0
    %1080 = vdwg.mxu0
    %v1081 = vmax.f32 %v974, 0.0
    %v1082 = vmax.f32 %v1078, 0.0
    %v1083 = vpack.c.bf16 %v1081, %v1081
    %v1084 = vpack.c.bf16 %v1082, %v1082
    %v1085 = vld [vmem:[#allocation8] sm:$0xff]
    %v1086 = vld [vmem:[#allocation8 + $0x8] sm:$0xf]
    %v1087 = vld [vmem:[#allocation8 + $0xc] sm:$0xff]
    %v1088 = vld [vmem:[#allocation8 + $0x14] sm:$0xf]
    %v1089 = vld [vmem:[#allocation8 + $0x18] sm:$0xff]
    %v1090 = vld [vmem:[#allocation8 + $0x20] sm:$0xf]
    %v1091 = vld [vmem:[#allocation8 + $0x24] sm:$0xff]
    %v1092 = vld [vmem:[#allocation8 + $0x2c] sm:$0xf]
    %v1093 = vld [vmem:[#allocation8 + $0x30] sm:$0xff]
    %v1094 = vld [vmem:[#allocation8 + $0x38] sm:$0xf]
    %v1095 = vld [vmem:[#allocation8 + $0x3c] sm:$0xff]
    %v1096 = vld [vmem:[#allocation8 + $0x44] sm:$0xf]
    %v1097 = vld [vmem:[#allocation8 + $0x48] sm:$0xff]
    %v1098 = vld [vmem:[#allocation8 + $0x50] sm:$0xf]
    %v1099 = vld [vmem:[#allocation8 + $0x54] sm:$0xff]
    %v1100 = vld [vmem:[#allocation8 + $0x5c] sm:$0xf]
    %v1101 = vld [vmem:[#allocation8 + $0x60] sm:$0xff]
    %v1102 = vld [vmem:[#allocation8 + $0x68] sm:$0xf]
    %v1103 = vld [vmem:[#allocation8 + $0x6c] sm:$0xff]
    %v1104 = vld [vmem:[#allocation8 + $0x74] sm:$0xf]
    %v1105 = vld [vmem:[#allocation8 + $0x78] sm:$0xff]
    %v1106 = vld [vmem:[#allocation8 + $0x80] sm:$0xf]
    %v1107 = vld [vmem:[#allocation8 + $0x84] sm:$0xff]
    %v1108 = vld [vmem:[#allocation8 + $0x8c] sm:$0xf]
    %v1109 = vld [vmem:[#allocation8 + $0x90] sm:$0xff]
    %v1110 = vld [vmem:[#allocation8 + $0x98] sm:$0xf]
    %v1111 = vld [vmem:[#allocation8 + $0x9c] sm:$0xff]
    %v1112 = vld [vmem:[#allocation8 + $0xa4] sm:$0xf]
    %v1113 = vld [vmem:[#allocation8 + $0xa8] sm:$0xff]
    %v1114 = vld [vmem:[#allocation8 + $0xb0] sm:$0xf]
    %v1115 = vld [vmem:[#allocation8 + $0xb4] sm:$0xff]
    %v1116 = vld [vmem:[#allocation8 + $0xbc] sm:$0xf]
    %v1117 = vld [vmem:[#allocation8 + $0xc0] sm:$0xff]
    %v1118 = vld [vmem:[#allocation8 + $0xc8] sm:$0xf]
    %v1119 = vld [vmem:[#allocation8 + $0xcc] sm:$0xff]
    %v1120 = vld [vmem:[#allocation8 + $0xd4] sm:$0xf]
    %v1121 = vld [vmem:[#allocation8 + $0xd8] sm:$0xff]
    %v1122 = vld [vmem:[#allocation8 + $0xe0] sm:$0xf]
    %v1123 = vld [vmem:[#allocation8 + $0xe4] sm:$0xff]
    %v1124 = vld [vmem:[#allocation8 + $0xec] sm:$0xf]
    %v1125 = vld [vmem:[#allocation8 + $0xf0] sm:$0xff]
    %v1126 = vld [vmem:[#allocation8 + $0xf8] sm:$0xf]
    %v1127 = vld [vmem:[#allocation8 + $0xfc] sm:$0xff]
    %v1128 = vld [vmem:[#allocation8 + $0x104] sm:$0xf]
    %v1129 = vld [vmem:[#allocation8 + $0x108] sm:$0xff]
    %v1130 = vld [vmem:[#allocation8 + $0x110] sm:$0xf]
    %v1131 = vld [vmem:[#allocation8 + $0x114] sm:$0xff]
    %v1132 = vld [vmem:[#allocation8 + $0x11c] sm:$0xf]
    %v1133 = vld [vmem:[#allocation8 + $0x120] sm:$0xff]
    %v1134 = vld [vmem:[#allocation8 + $0x128] sm:$0xf]
    %v1135 = vld [vmem:[#allocation8 + $0x12c] sm:$0xff]
    %v1136 = vld [vmem:[#allocation8 + $0x134] sm:$0xf]
    %v1137 = vld [vmem:[#allocation8 + $0x138] sm:$0xff]
    %v1138 = vld [vmem:[#allocation8 + $0x140] sm:$0xf]
    %v1139 = vld [vmem:[#allocation8 + $0x144] sm:$0xff]
    %v1140 = vld [vmem:[#allocation8 + $0x14c] sm:$0xf]
    %v1141 = vld [vmem:[#allocation8 + $0x150] sm:$0xff]
    %v1142 = vld [vmem:[#allocation8 + $0x158] sm:$0xf]
    %v1143 = vld [vmem:[#allocation8 + $0x15c] sm:$0xff]
    %v1144 = vld [vmem:[#allocation8 + $0x164] sm:$0xf]
    %v1145 = vld [vmem:[#allocation8 + $0x168] sm:$0xff]
    %v1146 = vld [vmem:[#allocation8 + $0x170] sm:$0xf]
    %v1147 = vld [vmem:[#allocation8 + $0x174] sm:$0xff]
    %v1148 = vld [vmem:[#allocation8 + $0x17c] sm:$0xf]
    %v1149 = vld [vmem:[%s4] sm:$0x7]
    %v1151 = vperm.slane %v1149, 0
    %v1152 = vperm.slane %v1149, 1
    %v1153 = vperm.slane %v1149, 2
    %v1221 = vunpack.c.l.b16 %v1085
    %v1222 = vunpack.c.h.b16 %v1085
    %v1223 = vunpack.c.l.b16 %v1086
    %v1224 = vunpack.c.l.b16 %v1087
    %v1225 = vunpack.c.h.b16 %v1087
    %v1226 = vunpack.c.l.b16 %v1088
    %v1227 = vunpack.c.l.b16 %v1089
    %v1228 = vunpack.c.h.b16 %v1089
    %v1229 = vunpack.c.l.b16 %v1090
    %v1230 = vunpack.c.l.b16 %v1091
    %v1231 = vunpack.c.h.b16 %v1091
    %v1232 = vunpack.c.l.b16 %v1092
    %v1233 = vunpack.c.l.b16 %v1093
    %v1234 = vunpack.c.h.b16 %v1093
    %v1235 = vunpack.c.l.b16 %v1094
    %v1236 = vunpack.c.l.b16 %v1095
    %v1237 = vunpack.c.h.b16 %v1095
    %v1238 = vunpack.c.l.b16 %v1096
    %v1239 = vunpack.c.l.b16 %v1097
    %v1240 = vunpack.c.h.b16 %v1097
    %v1241 = vunpack.c.l.b16 %v1098
    %v1242 = vunpack.c.l.b16 %v1099
    %v1243 = vunpack.c.h.b16 %v1099
    %v1244 = vunpack.c.l.b16 %v1100
    %v1245 = vunpack.c.l.b16 %v1101
    %v1246 = vunpack.c.h.b16 %v1101
    %v1247 = vunpack.c.l.b16 %v1102
    %v1248 = vunpack.c.l.b16 %v1103
    %v1249 = vunpack.c.h.b16 %v1103
    %v1250 = vunpack.c.l.b16 %v1104
    %v1251 = vunpack.c.l.b16 %v1105
    %v1252 = vunpack.c.h.b16 %v1105
    %v1253 = vunpack.c.l.b16 %v1106
    %v1254 = vunpack.c.l.b16 %v1107
    %v1255 = vunpack.c.h.b16 %v1107
    %v1256 = vunpack.c.l.b16 %v1108
    %v1257 = vunpack.c.l.b16 %v1109
    %v1258 = vunpack.c.h.b16 %v1109
    %v1259 = vunpack.c.l.b16 %v1110
    %v1260 = vunpack.c.l.b16 %v1111
    %v1261 = vunpack.c.h.b16 %v1111
    %v1262 = vunpack.c.l.b16 %v1112
    %v1263 = vunpack.c.l.b16 %v1113
    %v1264 = vunpack.c.h.b16 %v1113
    %v1265 = vunpack.c.l.b16 %v1114
    %v1266 = vunpack.c.l.b16 %v1115
    %v1267 = vunpack.c.h.b16 %v1115
    %v1268 = vunpack.c.l.b16 %v1116
    %v1269 = vunpack.c.l.b16 %v1117
    %v1270 = vunpack.c.h.b16 %v1117
    %v1271 = vunpack.c.l.b16 %v1118
    %v1272 = vunpack.c.l.b16 %v1119
    %v1273 = vunpack.c.h.b16 %v1119
    %v1274 = vunpack.c.l.b16 %v1120
    %v1275 = vunpack.c.l.b16 %v1121
    %v1276 = vunpack.c.h.b16 %v1121
    %v1277 = vunpack.c.l.b16 %v1122
    %v1278 = vunpack.c.l.b16 %v1123
    %v1279 = vunpack.c.h.b16 %v1123
    %v1280 = vunpack.c.l.b16 %v1124
    %v1281 = vunpack.c.l.b16 %v1125
    %v1282 = vunpack.c.h.b16 %v1125
    %v1283 = vunpack.c.l.b16 %v1126
    %v1284 = vunpack.c.l.b16 %v1127
    %v1285 = vunpack.c.h.b16 %v1127
    %v1286 = vunpack.c.l.b16 %v1128
    %v1287 = vunpack.c.l.b16 %v1129
    %v1288 = vunpack.c.h.b16 %v1129
    %v1289 = vunpack.c.l.b16 %v1130
    %v1290 = vunpack.c.l.b16 %v1131
    %v1291 = vunpack.c.h.b16 %v1131
    %v1292 = vunpack.c.l.b16 %v1132
    %v1293 = vunpack.c.l.b16 %v1133
    %v1294 = vunpack.c.h.b16 %v1133
    %v1295 = vunpack.c.l.b16 %v1134
    %v1296 = vunpack.c.l.b16 %v1135
    %v1297 = vunpack.c.h.b16 %v1135
    %v1298 = vunpack.c.l.b16 %v1136
    %v1299 = vunpack.c.l.b16 %v1137
    %v1300 = vunpack.c.h.b16 %v1137
    %v1301 = vunpack.c.l.b16 %v1138
    %v1302 = vunpack.c.l.b16 %v1139
    %v1303 = vunpack.c.h.b16 %v1139
    %v1304 = vunpack.c.l.b16 %v1140
    %v1305 = vunpack.c.l.b16 %v1141
    %v1306 = vunpack.c.h.b16 %v1141
    %v1307 = vunpack.c.l.b16 %v1142
    %v1308 = vunpack.c.l.b16 %v1143
    %v1309 = vunpack.c.h.b16 %v1143
    %v1310 = vunpack.c.l.b16 %v1144
    %v1311 = vunpack.c.l.b16 %v1145
    %v1312 = vunpack.c.h.b16 %v1145
    %v1313 = vunpack.c.l.b16 %v1146
    %v1314 = vunpack.c.l.b16 %v1147
    %v1315 = vunpack.c.h.b16 %v1147
    %v1316 = vunpack.c.l.b16 %v1148
    %v1317 = vpack.c.b16 %v1224, %v1221
    %v1318 = vpack.c.b16 %v1225, %v1222
    %v1319 = vpack.c.b16 %v1226, %v1223
    %v1320 = vpack.c.b16 %v1230, %v1227
    %v1321 = vpack.c.b16 %v1231, %v1228
    %v1322 = vpack.c.b16 %v1232, %v1229
    %v1323 = vpack.c.b16 %v1236, %v1233
    %v1324 = vpack.c.b16 %v1237, %v1234
    %v1325 = vpack.c.b16 %v1238, %v1235
    %v1326 = vpack.c.b16 %v1242, %v1239
    %v1327 = vpack.c.b16 %v1243, %v1240
    %v1328 = vpack.c.b16 %v1244, %v1241
    %v1329 = vpack.c.b16 %v1248, %v1245
    %v1330 = vpack.c.b16 %v1249, %v1246
    %v1331 = vpack.c.b16 %v1250, %v1247
    %v1332 = vpack.c.b16 %v1254, %v1251
    %v1333 = vpack.c.b16 %v1255, %v1252
    %v1334 = vpack.c.b16 %v1256, %v1253
    %v1335 = vpack.c.b16 %v1260, %v1257
    %v1336 = vpack.c.b16 %v1261, %v1258
    %v1337 = vpack.c.b16 %v1262, %v1259
    %v1338 = vpack.c.b16 %v1266, %v1263
    %v1339 = vpack.c.b16 %v1267, %v1264
    %v1340 = vpack.c.b16 %v1268, %v1265
    %v1341 = vpack.c.b16 %v1272, %v1269
    %v1342 = vpack.c.b16 %v1273, %v1270
    %v1343 = vpack.c.b16 %v1274, %v1271
    %v1344 = vpack.c.b16 %v1278, %v1275
    %v1345 = vpack.c.b16 %v1279, %v1276
    %v1346 = vpack.c.b16 %v1280, %v1277
    %v1347 = vpack.c.b16 %v1284, %v1281
    %v1348 = vpack.c.b16 %v1285, %v1282
    %v1349 = vpack.c.b16 %v1286, %v1283
    %v1350 = vpack.c.b16 %v1290, %v1287
    %v1351 = vpack.c.b16 %v1291, %v1288
    %v1352 = vpack.c.b16 %v1292, %v1289
    %v1353 = vpack.c.b16 %v1296, %v1293
    %v1354 = vpack.c.b16 %v1297, %v1294
    %v1355 = vpack.c.b16 %v1298, %v1295
    %v1356 = vpack.c.b16 %v1302, %v1299
    %v1357 = vpack.c.b16 %v1303, %v1300
    %v1358 = vpack.c.b16 %v1304, %v1301
    %v1359 = vpack.c.b16 %v1308, %v1305
    %v1360 = vpack.c.b16 %v1309, %v1306
    %v1361 = vpack.c.b16 %v1310, %v1307
    %v1362 = vpack.c.b16 %v1314, %v1311
    %v1363 = vpack.c.b16 %v1315, %v1312
    %v1364 = vpack.c.b16 %v1316, %v1313
    %1413 = vmatpush.bf16.msra.mxu0 %v1338
    %1414 = vmatpush.bf16.msra.mxu0 %v1335
    %1415 = vmatpush.bf16.msra.mxu0 %v1332
    %1416 = vmatpush.bf16.msra.mxu0 %v1329
    %1417 = vmatpush.bf16.msra.mxu0 %v1326
    %1418 = vmatpush.bf16.msra.mxu0 %v1323
    %1419 = vmatpush.bf16.msra.mxu0 %v1320
    %1420 = vmatpush.bf16.msra.mxu0 %v1317
    %1421 = vmatmul.bf16.gmra.mxu0 %v1083
    %v1422 = vpop.f32.mrf.mxu0
    %v1423 = vadd.f32 %v1151, %v1422
    %v1424 = vpop.f32.mrf.mxu0
    %1425 = vdwg.mxu0
    %1426 = vmatpush.bf16.msra.mxu0 %v1362
    %1427 = vmatpush.bf16.msra.mxu0 %v1359
    %1428 = vmatpush.bf16.msra.mxu0 %v1356
    %1429 = vmatpush.bf16.msra.mxu0 %v1353
    %1430 = vmatpush.bf16.msra.mxu0 %v1350
    %1431 = vmatpush.bf16.msra.mxu0 %v1347
    %1432 = vmatpush.bf16.msra.mxu0 %v1344
    %1433 = vmatpush.bf16.msra.mxu0 %v1341
    %1434 = vmatmul.bf16.gmra.mxu0 %v1084
    %v1435 = vpop.f32.mrf.mxu0
    %v1436 = vadd.f32 %v1423, %v1435
    %v1437 = vpop.f32.mrf.mxu0
    %1438 = vdwg.mxu0
    %1439 = vmatpush.bf16.msra.mxu0 %v1339
    %1440 = vmatpush.bf16.msra.mxu0 %v1336
    %1441 = vmatpush.bf16.msra.mxu0 %v1333
    %1442 = vmatpush.bf16.msra.mxu0 %v1330
    %1443 = vmatpush.bf16.msra.mxu0 %v1327
    %1444 = vmatpush.bf16.msra.mxu0 %v1324
    %1445 = vmatpush.bf16.msra.mxu0 %v1321
    %1446 = vmatpush.bf16.msra.mxu0 %v1318
    %1447 = vmatmul.bf16.gmra.mxu0 %v1083
    %v1448 = vpop.f32.mrf.mxu0
    %v1449 = vadd.f32 %v1152, %v1448
    %v1450 = vpop.f32.mrf.mxu0
    %1451 = vdwg.mxu0
    %1452 = vmatpush.bf16.msra.mxu0 %v1363
    %1453 = vmatpush.bf16.msra.mxu0 %v1360
    %1454 = vmatpush.bf16.msra.mxu0 %v1357
    %1455 = vmatpush.bf16.msra.mxu0 %v1354
    %1456 = vmatpush.bf16.msra.mxu0 %v1351
    %1457 = vmatpush.bf16.msra.mxu0 %v1348
    %1458 = vmatpush.bf16.msra.mxu0 %v1345
    %1459 = vmatpush.bf16.msra.mxu0 %v1342
    %1460 = vmatmul.bf16.gmra.mxu0 %v1084
    %v1461 = vpop.f32.mrf.mxu0
    %v1462 = vadd.f32 %v1449, %v1461
    %v1463 = vpop.f32.mrf.mxu0
    %1464 = vdwg.mxu0
    %1465 = vmatpush.bf16.msra.mxu0 %v1340
    %1466 = vmatpush.bf16.msra.mxu0 %v1337
    %1467 = vmatpush.bf16.msra.mxu0 %v1334
    %1468 = vmatpush.bf16.msra.mxu0 %v1331
    %1469 = vmatpush.bf16.msra.mxu0 %v1328
    %1470 = vmatpush.bf16.msra.mxu0 %v1325
    %1471 = vmatpush.bf16.msra.mxu0 %v1322
    %1472 = vmatpush.bf16.msra.mxu0 %v1319
    %1473 = vmatmul.bf16.gmra.mxu0 %v1083
    %v1474 = vpop.f32.mrf.mxu0
    %v1475 = vadd.f32 %v1153, %v1474
    %v1476 = vpop.f32.mrf.mxu0
    %1477 = vdwg.mxu0
    %1478 = vmatpush.bf16.msra.mxu0 %v1364
    %1479 = vmatpush.bf16.msra.mxu0 %v1361
    %1480 = vmatpush.bf16.msra.mxu0 %v1358
    %1481 = vmatpush.bf16.msra.mxu0 %v1355
    %1482 = vmatpush.bf16.msra.mxu0 %v1352
    %1483 = vmatpush.bf16.msra.mxu0 %v1349
    %1484 = vmatpush.bf16.msra.mxu0 %v1346
    %1485 = vmatpush.bf16.msra.mxu0 %v1343
    %1486 = vmatmul.bf16.gmra.mxu0 %v1084
    %v1487 = vpop.f32.mrf.mxu0
    %v1488 = vadd.f32 %v1475, %v1487
    %v1489 = vpop.f32.mrf.mxu0
    %1490 = vdwg.mxu0
    %v1494 = vrot.slane %v1462, 6
    %v1495 = vrot.slane %v1488, 4
    %vm1496 = vcmask 1041408
    %v1497 = vsel %vm1496, %v1436, %v1494
    %vm1498 = vcmask 1043456
    %v1499 = vsel %vm1498, %v1497, %v1495
    %1501 = vst [vmem:[#allocation10] sm:$0x3f] %v1499
    // Predicated region
    $region38: #{tpu_custom_call.1} parent=1 // pred_check
      _
    $region39: #{tpu_custom_call.1} parent=1 // pred_check_branch
      %1503 = sbr.rel (0) target = $region41
    $region40: #{tpu_custom_call.1} parent=1 // pred_region
      %1505 = vsyncadd [#allocation4], 0
      %s1507 = sshll.u32 [#allocation10], 4
      %s1508 = int_to_ptr.vmem [resolvable:$true] %s1507
      %s1509 = sshll.u32 %s5, 4
      %s1510 = int_to_ptr.hbm [resolvable:$true] %s1509
      %1512 = dma.vmem_to_hbm [thread:$0]  %s1508, 96, %s1510, [#allocation4]
    $region41: #{tpu_custom_call.1} parent=1 // pred_fallthru
      _
    // Predicated region
    $region42: #{tpu_custom_call.1} parent=1 // pred_check
      _
    $region43: #{tpu_custom_call.1} parent=1 // pred_check_branch
      %1514 = sbr.rel (0) target = $region45
    $region44: #{tpu_custom_call.1} parent=1 // pred_region
      %1516 = dma.done [#allocation4], 96
    $region45: #{tpu_custom_call.1} parent=1 // pred_fallthru
      _
    %1517 = vsyncpa [#allocation3], 1
    %1518 = vsyncpa [#allocation6], 1
    %1519 = vsyncpa [#allocation9], 1
    %1520 = vsyncpa [#allocation4], 1

</llo_original>
